<compile_context>
chip_gen: v6e
topology: v6e:2x2x1
jax: 0.10.0
libtpu: 0.0.40
codegen_flags: <defaults>
</compile_context>

<pallas_src>
import math

import jax
import jax.numpy as jnp
from jax.experimental import pallas as pl
from jax.experimental.pallas import tpu as pltpu


def _round_up(x, m):
    return ((x + m - 1) // m) * m


def _vmem_ceiling_bytes():
    """Usable VMEM budget for this kernel (generation-aware, with headroom)."""
    cap = 64 * 1024 * 1024  # conservative default (v7x per-TensorCore VMEM)
    try:
        cap = int(pltpu.get_tpu_info().vmem_capacity_bytes)
    except Exception:
        pass
    return max(cap - 16 * 1024 * 1024, 32 * 1024 * 1024)


def _linear_bias_kernel(x_ref, w_ref, b_ref, out_ref):
    """Whole-K resident fast path: one MXU pass + bias, no accumulator."""
    acc = jax.lax.dot_general(
        x_ref[...], w_ref[...],
        dimension_numbers=(((1,), (1,)), ((), ())),   # contract [TM,K] x [TN,K]
        preferred_element_type=jnp.float32)
    out_ref[...] = (acc + b_ref[...]).astype(out_ref.dtype)


def _linear_bias_kernel_ktiled(x_ref, w_ref, b_ref, out_ref):
    """K-tiled path: accumulate directly into the resident f32 out block."""
    k = pl.program_id(2)
    acc = jax.lax.dot_general(
        x_ref[...], w_ref[...],
        dimension_numbers=(((1,), (1,)), ((), ())),
        preferred_element_type=jnp.float32)

    @pl.when(k == 0)
    def _():
        out_ref[...] = acc + b_ref[...]       # bias folded into the init

    @pl.when(k > 0)
    def _():
        out_ref[...] += acc


def classifier_forward(x, weight, bias, *, compute_dtype=None, force_tk=None):
    """Pallas equivalent of Classifier.forward.

    Args:
      x:      [B, input_size]
      weight: [output_size, input_size]  (PyTorch nn.Linear layout, untransposed)
      bias:   [output_size]
      compute_dtype: optional matmul-input dtype (bf16 is MXU-native on
        v5e/v6e/v7x and halves HBM bytes); accumulation/bias stay f32.
        For best results persist the weight in this dtype across calls.
      force_tk: testing knob -- force a K tile size (multiple of 128).
    Returns:
      (logits [B, output_size] float32, x) -- matching the PyTorch tuple.
    """
    B, in_size = x.shape
    out_size, in_w = weight.shape
    assert in_w == in_size, "weight/in_size mismatch"

    cdt = x.dtype if compute_dtype is None else jnp.dtype(compute_dtype)
    xc = x if x.dtype == cdt else x.astype(cdt)
    wc = weight if weight.dtype == cdt else weight.astype(cdt)
    bc = bias.astype(jnp.float32).reshape(1, out_size)

    # ---- tile-size selection (sublane=8 / lane=128 friendly blocks) ----
    TM = min(256, _round_up(B, 8))
    TN = min(512, _round_up(out_size, 128))

    ceiling = _vmem_ceiling_bytes()
    budget = ceiling // 2                       # headroom for compiler scratch
    esz = jnp.dtype(cdt).itemsize
    bytes_per_k = 2 * (TM + TN) * esz           # double-buffered x + W columns
    fixed = 2 * TM * TN * 4 + 2 * TN * 4 + (1 << 20)
    k_resident_max = max((budget - fixed) // bytes_per_k, 512)

    if force_tk is not None and in_size > force_tk:
        TK = int(force_tk)
    elif in_size <= k_resident_max:
        TK = in_size                            # whole K resident, grid K == 1
    else:
        TK = int(max(512, min(2048, (k_resident_max // 512) * 512)))

    if TK >= in_size:
        TK, grid_k = in_size, 1
    else:
        grid_k = int(pl.cdiv(in_size, TK))
        Ip = grid_k * TK
        if Ip != in_size:
            # K must be zero-padded: OOB K elements would corrupt the reduction.
            xc = jnp.pad(xc, ((0, 0), (0, Ip - in_size)))
            wc = jnp.pad(wc, ((0, 0), (0, Ip - in_size)))

    grid_m = int(pl.cdiv(B, TM))
    grid_n = int(pl.cdiv(out_size, TN))

    # ---- VMEM budget: double-buffered x/W/bias tiles + resident out block ----
    need = (2 * TM * TK * esz + 2 * TN * TK * esz + 2 * TN * 4 + 2 * TM * TN * 4)
    vmem_limit = int(min(ceiling, max(2 * need, 16 * 1024 * 1024)))

    cost = pl.CostEstimate(
        flops=2 * B * in_size * out_size,
        transcendentals=0,
        bytes_accessed=int((B * in_size + out_size * in_size) * esz
                           + (out_size + B * out_size) * 4),
    )

    if grid_k == 1:
        grid = (grid_m, grid_n)
        in_specs = [
            pl.BlockSpec((TM, TK), lambda i, j: (i, 0)),   # x    [B, in]
            pl.BlockSpec((TN, TK), lambda i, j: (j, 0)),   # W    [out, in]
            pl.BlockSpec((1, TN), lambda i, j: (0, j)),    # bias [1, out]
        ]
        out_specs = pl.BlockSpec((TM, TN), lambda i, j: (i, j))
        kernel = _linear_bias_kernel
        dims = ("parallel", "parallel")
    else:
        grid = (grid_m, grid_n, grid_k)
        in_specs = [
            pl.BlockSpec((TM, TK), lambda i, j, k: (i, k)),
            pl.BlockSpec((TN, TK), lambda i, j, k: (j, k)),
            pl.BlockSpec((1, TN), lambda i, j, k: (0, j)),
        ]
        out_specs = pl.BlockSpec((TM, TN), lambda i, j, k: (i, j))
        kernel = _linear_bias_kernel_ktiled
        dims = ("parallel", "parallel", "arbitrary")

    logits = pl.pallas_call(
        kernel,
        out_shape=jax.ShapeDtypeStruct((B, out_size), jnp.float32),
        grid=grid,
        in_specs=in_specs,
        out_specs=out_specs,
        compiler_params=pltpu.CompilerParams(
            dimension_semantics=dims,
            vmem_limit_bytes=vmem_limit),
        cost_estimate=cost,
    )(xc, wc, bc)

    return logits, x


def init_classifier_params(key, input_size, output_size):
    """Deterministic Xavier-uniform weight + 0.01 bias (matches init_weights)."""
    limit = math.sqrt(6.0 / (input_size + output_size))
    weight = jax.random.uniform(
        key, (output_size, input_size), dtype=jnp.float32,
        minval=-limit, maxval=limit)
    bias = jnp.full((output_size,), 0.01, dtype=jnp.float32)
    return weight, bias


if __name__ == "__main__":
    key = jax.random.PRNGKey(0)
    k_x, k_w, k_x2, k_w2 = jax.random.split(key, 4)

    # --- small classifier-head shapes (whole-K-resident fast path) ---
    B, input_size, output_size = 2, 32, 8
    x = jax.random.normal(k_x, (B, input_size), dtype=jnp.float32)
    weight, bias = init_classifier_params(k_w, input_size, output_size)

    logits, x_out = classifier_forward(x, weight, bias)
    jax.block_until_ready((logits, x_out))

    ref = x @ weight.T + bias
    assert logits.shape == (B, output_size)
    assert x_out.shape == (B, input_size)
    assert jnp.allclose(logits, ref, atol=1e-5), "mismatch vs reference"
    assert jnp.array_equal(x_out, x), "passthrough x mismatch"

    # --- exercise the K-tiled accumulate-into-out path (still small) ---
    B2, in2, out2 = 4, 1024, 16
    x2 = jax.random.normal(k_x2, (B2, in2), dtype=jnp.float32)
    w2, b2 = init_classifier_params(k_w2, in2, out2)
    logits2, _ = classifier_forward(x2, w2, b2, force_tk=512)
    jax.block_until_ready(logits2)
    ref2 = x2 @ w2.T + b2
    assert jnp.allclose(logits2, ref2, atol=1e-4), "mismatch vs reference (K-tiled)"

    print("KERNEL_OK")
</pallas_src>

<mosaic_0001>
module attributes {stable_mosaic.version = 11 : i64} {
  func.func @_linear_bias_kernel(%arg0: i32, %arg1: i32, %arg2: memref<8x32xf32, #tpu.memory_space<vmem>>, %arg3: memref<128x32xf32, #tpu.memory_space<vmem>>, %arg4: memref<1x128xf32, #tpu.memory_space<vmem>>, %arg5: memref<8x128xf32, #tpu.memory_space<vmem>>) attributes {dimension_semantics = [#tpu.dimension_semantics<parallel>, #tpu.dimension_semantics<parallel>], iteration_bounds = array<i64: 1, 1>, scalar_prefetch = 0 : i64, scratch_operands = 0 : i64, tpu.core_type = #tpu.core_type<tc>, window_params = [{transform_indices = @transform_0, window_bounds = array<i64: 8, 32>}, {transform_indices = @transform_1, window_bounds = array<i64: 128, 32>}, {transform_indices = @transform_2, window_bounds = array<i64: 1, 128>}, {transform_indices = @transform_3, window_bounds = array<i64: 8, 128>}]} {
    %c0 = arith.constant 0 : index
    %c0_0 = arith.constant 0 : index
    %0 = vector.load %arg2[%c0, %c0_0] : memref<8x32xf32, #tpu.memory_space<vmem>>, vector<8x32xf32>
    %c0_1 = arith.constant 0 : index
    %c0_2 = arith.constant 0 : index
    %1 = vector.load %arg3[%c0_1, %c0_2] : memref<128x32xf32, #tpu.memory_space<vmem>>, vector<128x32xf32>
    %cst = arith.constant dense<0.000000e+00> : vector<8x128xf32>
    %2 = tpu.matmul %0, %1, %cst {dimension_numbers = #tpu.dot_dimension_numbers<[1], [1], [0], [0], [0, 0, 1, 0], [], []>} : vector<8x32xf32>, vector<128x32xf32>, vector<8x128xf32> -> vector<8x128xf32>
    %c0_3 = arith.constant 0 : index
    %c0_4 = arith.constant 0 : index
    %3 = vector.load %arg4[%c0_3, %c0_4] : memref<1x128xf32, #tpu.memory_space<vmem>>, vector<1x128xf32>
    %4 = vector.broadcast %3 : vector<1x128xf32> to vector<8x128xf32>
    %5 = arith.addf %2, %4 : vector<8x128xf32>
    %c0_5 = arith.constant 0 : index
    %c0_6 = arith.constant 0 : index
    %6 = vector.load %arg5[%c0_5, %c0_6] : memref<8x128xf32, #tpu.memory_space<vmem>>, vector<8x128xf32>
    tpu.vector_store %arg5[%c0_5, %c0_6], %5 {strides = array<i32>} : memref<8x128xf32, #tpu.memory_space<vmem>>, vector<8x128xf32>,
    return
  }
  func.func @transform_0(%arg0: i32, %arg1: i32) -> (i32, i32) {
    %c0_i32 = arith.constant 0 : i32
    %c0_i32_0 = arith.constant 0 : i32
    return %arg0, %c0_i32 : i32, i32
  }
  func.func @transform_1(%arg0: i32, %arg1: i32) -> (i32, i32) {
    %c0_i32 = arith.constant 0 : i32
    %c0_i32_0 = arith.constant 0 : i32
    return %arg1, %c0_i32 : i32, i32
  }
  func.func @transform_2(%arg0: i32, %arg1: i32) -> (i32, i32) {
    %c0_i32 = arith.constant 0 : i32
    %c0_i32_0 = arith.constant 0 : i32
    return %c0_i32, %arg1 : i32, i32
  }
  func.func @transform_3(%arg0: i32, %arg1: i32) -> (i32, i32) {
    %c0_i32 = arith.constant 0 : i32
    return %arg0, %arg1 : i32, i32
  }
}

</mosaic_0001>

<llo_original>
// kernel: tpu_custom_call.1
$region0: #{tpu_custom_call.1}
  #allocation0 [shape = 'u32[]', space=smem, size = 0x4, offset = 0x4, fixed_abs, tag = 'smem constant byte address 0x4 - core index']
  #allocation1 [shape = 'u32[144,128]{1,0:T(1,128)}', space=vmem, size = 0x12000, scoped, tag = 'internal scratch']
  %s0 = inlined_call_operand.hbm [shape: f32[2,32], index: 0, kind: input, shape index: {}]
  %s1 = inlined_call_operand.hbm [shape: f32[8,32], index: 1, kind: input, shape index: {}]
  %s2 = inlined_call_operand.vmem [shape: f32[1,8], index: 2, kind: input, shape index: {}]
  %s3 = inlined_call_operand.hbm [shape: f32[2,8], index: 3, kind: output, shape index: {}]
  %s4 = sld [smem:[#allocation0]]
  $region30: #{tpu_custom_call.1} parent=0
    _
  %s6 = ssub.s32 1, %s4
  %s7 = scalar_select 0, %s6, %s4
  $region1: #{tpu_custom_call.1} parent=0
    #allocation2 [shape = 'u8[4096]{0}', space=vmem, size = 0x1000, scoped, tag = 'input window, operand 0, single buffered']
    #allocation3 [shape = 's32[1]{0}', space=sflag, size = 0x4, scoped, tag = 'scoped memory for tpu_custom_call.1']
    #allocation4 [shape = 's32[1]{0}', space=sflag, size = 0x4, scoped, tag = 'scoped memory for tpu_custom_call.1']
    #allocation5 [shape = 'u8[65536]{0}', space=vmem, size = 0x10000, scoped, tag = 'input window, operand 1, single buffered']
    #allocation6 [shape = 's32[1]{0}', space=sflag, size = 0x4, scoped, tag = 'scoped memory for tpu_custom_call.1']
    #allocation7 [shape = 'u8[4096]{0}', space=vmem, size = 0x1000, scoped, tag = 'output window, operand 0, single buffered']
    %8 = vsyncpa [#allocation3], 0
    %9 = vsyncpa [#allocation6], 0
    %10 = vsyncpa [#allocation4], 0
    // Predicated region
    $region2: #{tpu_custom_call.1} parent=1 // pred_check
      _
    $region3: #{tpu_custom_call.1} parent=1 // pred_check_branch
      %12 = sbr.rel (0) target = $region5
    $region4: #{tpu_custom_call.1} parent=1 // pred_region
      %s14 = ssub.s32 128, 32
      %15 = vsyncadd [#allocation3], %s14
      %s16 = sshll.u32 [#allocation2], 4
      %s17 = int_to_ptr.vmem [resolvable:$true] %s16
      %22 = dma.hbm_to_vmem [thread:$0]  %s0, 32, %s17, [#allocation3], 32, 32, 2
    $region5: #{tpu_custom_call.1} parent=1 // pred_fallthru
      _
    // Predicated region
    $region6: #{tpu_custom_call.1} parent=1 // pred_check
      _
    $region7: #{tpu_custom_call.1} parent=1 // pred_check_branch
      %24 = sbr.rel (0) target = $region9
    $region8: #{tpu_custom_call.1} parent=1 // pred_region
      %s26 = ssub.s32 2048, 128
      %27 = vsyncadd [#allocation6], %s26
      %s28 = sshll.u32 [#allocation5], 4
      %s29 = int_to_ptr.vmem [resolvable:$true] %s28
      %34 = dma.hbm_to_vmem [thread:$0]  %s1, 128, %s29, [#allocation6], 128, 128, 8
    $region9: #{tpu_custom_call.1} parent=1 // pred_fallthru
      _
    // Predicated region
    $region10: #{tpu_custom_call.1} parent=1 // pred_check
      _
    $region11: #{tpu_custom_call.1} parent=1 // pred_check_branch
      %36 = sbr.rel (0) target = $region13
    $region12: #{tpu_custom_call.1} parent=1 // pred_region
      _
    $region13: #{tpu_custom_call.1} parent=1 // pred_fallthru
      _
    // Predicated region
    $region14: #{tpu_custom_call.1} parent=1 // pred_check
      _
    $region15: #{tpu_custom_call.1} parent=1 // pred_check_branch
      %38 = sbr.rel (0) target = $region17
    $region16: #{tpu_custom_call.1} parent=1 // pred_region
      %39 = dma.done [#allocation3], 128
    $region17: #{tpu_custom_call.1} parent=1 // pred_fallthru
      _
    // Predicated region
    $region18: #{tpu_custom_call.1} parent=1 // pred_check
      _
    $region19: #{tpu_custom_call.1} parent=1 // pred_check_branch
      %41 = sbr.rel (0) target = $region21
    $region20: #{tpu_custom_call.1} parent=1 // pred_region
      %42 = dma.done [#allocation6], 2048
    $region21: #{tpu_custom_call.1} parent=1 // pred_fallthru
      _
    %v43 = vld [vmem:[#allocation2] sm:$0xff]
    %v44 = vld [vmem:[#allocation5] sm:$0xff]
    %v45 = vld [vmem:[#allocation5 + $0x8] sm:$0xff]
    %v46 = vld [vmem:[#allocation5 + $0x10] sm:$0xff]
    %v47 = vld [vmem:[#allocation5 + $0x18] sm:$0xff]
    %v48 = vld [vmem:[#allocation5 + $0x20] sm:$0xff]
    %v49 = vld [vmem:[#allocation5 + $0x28] sm:$0xff]
    %v50 = vld [vmem:[#allocation5 + $0x30] sm:$0xff]
    %v51 = vld [vmem:[#allocation5 + $0x38] sm:$0xff]
    %v52 = vld [vmem:[#allocation5 + $0x40] sm:$0xff]
    %v53 = vld [vmem:[#allocation5 + $0x48] sm:$0xff]
    %v54 = vld [vmem:[#allocation5 + $0x50] sm:$0xff]
    %v55 = vld [vmem:[#allocation5 + $0x58] sm:$0xff]
    %v56 = vld [vmem:[#allocation5 + $0x60] sm:$0xff]
    %v57 = vld [vmem:[#allocation5 + $0x68] sm:$0xff]
    %v58 = vld [vmem:[#allocation5 + $0x70] sm:$0xff]
    %v59 = vld [vmem:[#allocation5 + $0x78] sm:$0xff]
    %v60 = vld [vmem:[%s2] sm:$0x1]
    %v62 = vlaneseq
    %v63 = vshrl.u32 %v62, 7
    %v64 = vsub.s32 0, %v63
    %v65 = vrot.slane %v60, %v64
    %vm67 = vcmask 261120
    %v69 = vsel %vm67, %v43, 0
    %v72 = vsel %vm67, %v44, 0
    %v75 = vsel %vm67, %v45, 0
    %v78 = vsel %vm67, %v46, 0
    %v81 = vsel %vm67, %v47, 0
    %v84 = vsel %vm67, %v48, 0
    %v87 = vsel %vm67, %v49, 0
    %v90 = vsel %vm67, %v50, 0
    %v93 = vsel %vm67, %v51, 0
    %v96 = vsel %vm67, %v52, 0
    %v99 = vsel %vm67, %v53, 0
    %v102 = vsel %vm67, %v54, 0
    %v105 = vsel %vm67, %v55, 0
    %v108 = vsel %vm67, %v56, 0
    %v111 = vsel %vm67, %v57, 0
    %v114 = vsel %vm67, %v58, 0
    %v117 = vsel %vm67, %v59, 0
    %119 = vmatprep.subr.mxu0 0.0
    %120 = vmatpush1.xpose.msra.mxu0 %v117
    %121 = vmatprep.subr.mxu0 0.0
    %122 = vmatpush1.xpose.msra.mxu0 %v114
    %123 = vmatprep.subr.mxu0 0.0
    %124 = vmatpush1.xpose.msra.mxu0 %v111
    %125 = vmatprep.subr.mxu0 0.0
    %126 = vmatpush1.xpose.msra.mxu0 %v108
    %127 = vmatprep.subr.mxu0 0.0
    %128 = vmatpush1.xpose.msra.mxu0 %v105
    %129 = vmatprep.subr.mxu0 0.0
    %130 = vmatpush1.xpose.msra.mxu0 %v102
    %131 = vmatprep.subr.mxu0 0.0
    %132 = vmatpush1.xpose.msra.mxu0 %v99
    %133 = vmatprep.subr.mxu0 0.0
    %134 = vmatpush1.xpose.msra.mxu0 %v96
    %135 = vmatprep.subr.mxu0 0.0
    %136 = vmatpush1.xpose.msra.mxu0 %v93
    %137 = vmatprep.subr.mxu0 0.0
    %138 = vmatpush1.xpose.msra.mxu0 %v90
    %139 = vmatprep.subr.mxu0 0.0
    %140 = vmatpush1.xpose.msra.mxu0 %v87
    %141 = vmatprep.subr.mxu0 0.0
    %142 = vmatpush1.xpose.msra.mxu0 %v84
    %143 = vmatprep.subr.mxu0 0.0
    %144 = vmatpush1.xpose.msra.mxu0 %v81
    %145 = vmatprep.subr.mxu0 0.0
    %146 = vmatpush1.xpose.msra.mxu0 %v78
    %147 = vmatprep.subr.mxu0 0.0
    %148 = vmatpush1.xpose.msra.mxu0 %v75
    %149 = vmatprep.subr.mxu0 0.0
    %150 = vmatpush1.xpose.msra.mxu0 %v72
    %151 = vmatprep.subr.mxu0 0.0
    %152 = vmatpush2.xpose.msra.mxu0 0.0
    %153 = vmatprep.subr.mxu0 0.0
    %154 = vmatpush2.xpose.msra.mxu0 0.0
    %155 = vmatprep.subr.mxu0 0.0
    %156 = vmatpush2.xpose.msra.mxu0 0.0
    %157 = vmatprep.subr.mxu0 0.0
    %158 = vmatpush2.xpose.msra.mxu0 0.0
    %159 = vmatprep.subr.mxu0 0.0
    %160 = vmatpush2.xpose.msra.mxu0 0.0
    %161 = vmatprep.subr.mxu0 0.0
    %162 = vmatpush2.xpose.msra.mxu0 0.0
    %163 = vmatprep.subr.mxu0 0.0
    %164 = vmatpush2.xpose.msra.mxu0 0.0
    %165 = vmatprep.subr.mxu0 0.0
    %166 = vmatpush2.xpose.msra.mxu0 0.0
    %167 = vmatprep.subr.mxu0 0.0
    %168 = vmatpush2.xpose.msra.mxu0 0.0
    %169 = vmatprep.subr.mxu0 0.0
    %170 = vmatpush2.xpose.msra.mxu0 0.0
    %171 = vmatprep.subr.mxu0 0.0
    %172 = vmatpush2.xpose.msra.mxu0 0.0
    %173 = vmatprep.subr.mxu0 0.0
    %174 = vmatpush2.xpose.msra.mxu0 0.0
    %175 = vmatprep.subr.mxu0 0.0
    %176 = vmatpush2.xpose.msra.mxu0 0.0
    %177 = vmatprep.subr.mxu0 0.0
    %178 = vmatpush2.xpose.msra.mxu0 0.0
    %179 = vmatprep.subr.mxu0 0.0
    %180 = vmatpush2.xpose.msra.mxu0 0.0
    %181 = vmatprep.subr.mxu0 0.0
    %182 = vmatpush2.xpose.msra.mxu0 0.0
    %183 = vmatprep.mubr.f32.mxu0 0.0
    %184 = vmatmul.mubr.f32.gmra.mxu0 %v69
    %v185 = vpop.f32.mrf.mxu0
    %v186 = vadd.f32 %v65, %v185
    %v187 = vpop.f32.mrf.mxu0
    %188 = vdwg.mxu0
    %189 = vst [vmem:[#allocation7] sm:$0xff] %v186
    // Predicated region
    $region22: #{tpu_custom_call.1} parent=1 // pred_check
      _
    $region23: #{tpu_custom_call.1} parent=1 // pred_check_branch
      %191 = sbr.rel (0) target = $region25
    $region24: #{tpu_custom_call.1} parent=1 // pred_region
      %s193 = ssub.s32 128, 32
      %194 = vsyncadd [#allocation4], %s193
      %s195 = sshll.u32 [#allocation7], 4
      %s196 = int_to_ptr.vmem [resolvable:$true] %s195
      %201 = dma.vmem_to_hbm [thread:$0]  %s196, 32, %s3, [#allocation4], 32, 32, 2
    $region25: #{tpu_custom_call.1} parent=1 // pred_fallthru
      _
    // Predicated region
    $region26: #{tpu_custom_call.1} parent=1 // pred_check
      _
    $region27: #{tpu_custom_call.1} parent=1 // pred_check_branch
      %203 = sbr.rel (0) target = $region29
    $region28: #{tpu_custom_call.1} parent=1 // pred_region
      %204 = dma.done [#allocation4], 128
    $region29: #{tpu_custom_call.1} parent=1 // pred_fallthru
      _
    %205 = vsyncpa [#allocation3], 1
    %206 = vsyncpa [#allocation6], 1
    %207 = vsyncpa [#allocation4], 1

</llo_original>
